<compile_context>
chip_gen: v7x
topology: tpu7x:2x2x1
jax: 0.10.0
libtpu: 0.0.40
codegen_flags: <defaults>
</compile_context>

<pallas_src>
import functools

import jax
import jax.numpy as jnp
from jax.experimental import pallas as pl
from jax.experimental.pallas import tpu as pltpu


_LANE = 128  # pad node dim and all feature dims to multiples of this (lane-dense)


def _round_up(x, m):
    return ((x + m - 1) // m) * m


# ----------------------------------------------------------------------------
# Fused Pallas kernel: the full GCN stack in a single call.
#   layer l:  H <- Â @ (H @ W_l) + b_l   (ReLU on all but the last layer)
# ----------------------------------------------------------------------------
def _gcn_stack_kernel(adj_ref, x_ref, *refs, num_layers):
    w_refs = refs[:num_layers]
    b_refs = refs[num_layers:2 * num_layers]
    o_ref = refs[2 * num_layers]

    adj = adj_ref[...]                        # bf16 [Np, Np], loaded once, reused per layer
    h = x_ref[...].astype(jnp.float32)        # f32  [Np, F0p]

    for li in range(num_layers):              # static unroll: per-layer shapes differ
        w = w_refs[li][...].astype(jnp.bfloat16)   # in-kernel cast (VPU)
        b = b_refs[li][...]                        # f32 (1, Foutp)
        # Feature transform  H @ W   (MXU, bf16 in / f32 acc)
        xw = jnp.dot(h.astype(jnp.bfloat16), w, preferred_element_type=jnp.float32)
        # Aggregation        Â @ XW  (MXU, bf16 in / f32 acc)
        agg = jnp.dot(adj, xw.astype(jnp.bfloat16), preferred_element_type=jnp.float32)
        h = agg + b                                # bias broadcast (VPU, f32)
        if li < num_layers - 1:
            h = jnp.maximum(h, 0.0)                # ReLU between layers

    o_ref[...] = h.astype(o_ref.dtype)


# ----------------------------------------------------------------------------
# Glue: dense symmetric-normalized adjacency (PyG gcn_norm with self-loops),
# built directly at the padded node count; padded rows/cols stay exactly zero.
# Duplicate edges accumulate weight > 1 via scatter-add (matches PyG semantics).
# ----------------------------------------------------------------------------
def build_normalized_adjacency(edge_index, num_nodes, n_pad):
    src = edge_index[0]
    dst = edge_index[1]
    loops = jnp.arange(num_nodes, dtype=edge_index.dtype)
    src = jnp.concatenate([src, loops])
    dst = jnp.concatenate([dst, loops])

    # A[i, j] = 1 for message edge j -> i (plus self loops), in f32 for exact norm.
    adj = jnp.zeros((n_pad, n_pad), jnp.float32).at[dst, src].add(1.0)

    deg = adj.sum(axis=1)                                   # in-degree incl. self loop
    deg_safe = jnp.where(deg > 0, deg, 1.0)
    deg_inv_sqrt = jnp.where(deg > 0, jax.lax.rsqrt(deg_safe), 0.0)
    adj_norm = deg_inv_sqrt[:, None] * adj * deg_inv_sqrt[None, :]
    # Store / stream Â as bf16 (halves HBM bytes of the dominant operand).
    return adj_norm.astype(jnp.bfloat16)


# ----------------------------------------------------------------------------
# Parameters: Glorot-uniform weights + zero bias per GCNConv layer.
# ----------------------------------------------------------------------------
def init_gcn_params(key, num_features, num_classes, layers):
    dims = [num_features] + list(layers) + [num_classes]
    params = []
    for li in range(len(dims) - 1):
        fan_in, fan_out = dims[li], dims[li + 1]
        key, sub = jax.random.split(key)
        limit = jnp.sqrt(6.0 / (fan_in + fan_out))
        w = jax.random.uniform(sub, (fan_in, fan_out), jnp.float32,
                               minval=-limit, maxval=limit)
        b = jnp.zeros((fan_out,), jnp.float32)
        params.append((w, b))
    return params


# ----------------------------------------------------------------------------
# Forward: pad to lane-dense shapes, one fused pallas_call, slice real output.
# ----------------------------------------------------------------------------
def gcn_network_forward(params, x, edge_index):
    num_nodes, num_features = x.shape
    num_layers = len(params)

    dims = [num_features] + [w.shape[1] for (w, _) in params]
    dims_pad = [_round_up(d, _LANE) for d in dims]
    n_pad = _round_up(num_nodes, _LANE)

    # Â built once at padded size, bf16-stored.
    adj = build_normalized_adjacency(edge_index, num_nodes, n_pad)

    # Zero-pad node features, weights and biases (done once; zeros are inert).
    x_p = jnp.zeros((n_pad, dims_pad[0]), jnp.float32)
    x_p = x_p.at[:num_nodes, :num_features].set(x)
    ws, bs = [], []
    for li, (w, b) in enumerate(params):
        d_in, d_out = w.shape
        w_p = jnp.zeros((dims_pad[li], dims_pad[li + 1]), jnp.float32)
        w_p = w_p.at[:d_in, :d_out].set(w)
        b_p = jnp.zeros((1, dims_pad[li + 1]), jnp.float32)
        b_p = b_p.at[0, :d_out].set(b)
        ws.append(w_p)
        bs.append(b_p)

    # Advisory cost estimate for XLA's scheduler.
    flops = 0
    bytes_accessed = adj.size * adj.dtype.itemsize + x_p.size * 4
    for li in range(num_layers):
        flops += 2 * n_pad * dims_pad[li] * dims_pad[li + 1]   # H @ W
        flops += 2 * n_pad * n_pad * dims_pad[li + 1]          # Â @ (HW)
        bytes_accessed += ws[li].size * 4 + bs[li].size * 4
    bytes_accessed += n_pad * dims_pad[-1] * 4
    cost = pl.CostEstimate(flops=int(flops), transcendentals=0,
                           bytes_accessed=int(bytes_accessed))

    kernel = functools.partial(_gcn_stack_kernel, num_layers=num_layers)

    def full_block(shape):
        return pl.BlockSpec(shape, lambda i: (0,) * len(shape))

    in_specs = [full_block(adj.shape), full_block(x_p.shape)]
    in_specs += [full_block(w.shape) for w in ws]
    in_specs += [full_block(b.shape) for b in bs]

    out_pad = pl.pallas_call(
        kernel,
        out_shape=jax.ShapeDtypeStruct((n_pad, dims_pad[-1]), jnp.float32),
        grid=(1,),
        in_specs=in_specs,
        out_specs=full_block((n_pad, dims_pad[-1])),
        compiler_params=pltpu.CompilerParams(dimension_semantics=("arbitrary",)),
        cost_estimate=cost,
    )(adj, x_p, *ws, *bs)

    # Slice back to the real (nodes, classes) shape outside the kernel.
    return out_pad[:num_nodes, :dims[-1]]


# ----------------------------------------------------------------------------
# Demo
# ----------------------------------------------------------------------------
if __name__ == "__main__":
    key = jax.random.PRNGKey(0)

    num_nodes = 16
    num_features = 8
    hidden_layers = [32, 16]
    num_classes = 4

    # Deterministic node features
    key, kx = jax.random.split(key)
    x = jax.random.normal(kx, (num_nodes, num_features), dtype=jnp.float32)

    # Deterministic small graph: a ring plus a few chords (directed edge list)
    ring_src = jnp.arange(num_nodes, dtype=jnp.int32)
    ring_dst = (ring_src + 1) % num_nodes
    chord_src = jnp.array([0, 3, 5, 7, 10, 12], dtype=jnp.int32)
    chord_dst = jnp.array([8, 11, 13, 2, 4, 1], dtype=jnp.int32)
    edge_index = jnp.stack(
        [jnp.concatenate([ring_src, chord_src]),
         jnp.concatenate([ring_dst, chord_dst])],
        axis=0,
    )  # shape (2, E)

    key, kp = jax.random.split(key)
    params = init_gcn_params(kp, num_features, num_classes, hidden_layers)

    out = gcn_network_forward(params, x, edge_index)
    out = jax.block_until_ready(out)

    assert out.shape == (num_nodes, num_classes)
    assert jnp.all(jnp.isfinite(out))
    print("KERNEL_OK")
</pallas_src>

<mosaic_0001>
module attributes {stable_mosaic.version = 11 : i64} {
  func.func @_gcn_stack_kernel(%arg0: i32, %arg1: memref<128x128xbf16, #tpu.memory_space<vmem>>, %arg2: memref<128x128xf32, #tpu.memory_space<vmem>>, %arg3: memref<128x128xf32, #tpu.memory_space<vmem>>, %arg4: memref<128x128xf32, #tpu.memory_space<vmem>>, %arg5: memref<128x128xf32, #tpu.memory_space<vmem>>, %arg6: memref<1x128xf32, #tpu.memory_space<vmem>>, %arg7: memref<1x128xf32, #tpu.memory_space<vmem>>, %arg8: memref<1x128xf32, #tpu.memory_space<vmem>>, %arg9: memref<128x128xf32, #tpu.memory_space<vmem>>) attributes {dimension_semantics = [#tpu.dimension_semantics<arbitrary>], iteration_bounds = array<i64: 1>, scalar_prefetch = 0 : i64, scratch_operands = 0 : i64, tpu.core_type = #tpu.core_type<tc>, window_params = [{pipeline_mode = #tpu.pipeline_mode<synchronous>, transform_indices = @transform_0, window_bounds = array<i64: 128, 128>}, {pipeline_mode = #tpu.pipeline_mode<synchronous>, transform_indices = @transform_1, window_bounds = array<i64: 128, 128>}, {pipeline_mode = #tpu.pipeline_mode<synchronous>, transform_indices = @transform_2, window_bounds = array<i64: 128, 128>}, {pipeline_mode = #tpu.pipeline_mode<synchronous>, transform_indices = @transform_3, window_bounds = array<i64: 128, 128>}, {pipeline_mode = #tpu.pipeline_mode<synchronous>, transform_indices = @transform_4, window_bounds = array<i64: 128, 128>}, {pipeline_mode = #tpu.pipeline_mode<synchronous>, transform_indices = @transform_5, window_bounds = array<i64: 1, 128>}, {pipeline_mode = #tpu.pipeline_mode<synchronous>, transform_indices = @transform_6, window_bounds = array<i64: 1, 128>}, {pipeline_mode = #tpu.pipeline_mode<synchronous>, transform_indices = @transform_7, window_bounds = array<i64: 1, 128>}, {pipeline_mode = #tpu.pipeline_mode<synchronous>, transform_indices = @transform_8, window_bounds = array<i64: 128, 128>}]} {
    %c0 = arith.constant 0 : index
    %c0_0 = arith.constant 0 : index
    %0 = vector.load %arg1[%c0, %c0_0] : memref<128x128xbf16, #tpu.memory_space<vmem>>, vector<128x128xbf16>
    %c0_1 = arith.constant 0 : index
    %c0_2 = arith.constant 0 : index
    %1 = vector.load %arg2[%c0_1, %c0_2] : memref<128x128xf32, #tpu.memory_space<vmem>>, vector<128x128xf32>
    %c0_3 = arith.constant 0 : index
    %c0_4 = arith.constant 0 : index
    %2 = vector.load %arg3[%c0_3, %c0_4] : memref<128x128xf32, #tpu.memory_space<vmem>>, vector<128x128xf32>
    %3 = arith.truncf %2 : vector<128x128xf32> to vector<128x128xbf16>
    %c0_5 = arith.constant 0 : index
    %c0_6 = arith.constant 0 : index
    %4 = vector.load %arg6[%c0_5, %c0_6] : memref<1x128xf32, #tpu.memory_space<vmem>>, vector<1x128xf32>
    %5 = arith.truncf %1 : vector<128x128xf32> to vector<128x128xbf16>
    %cst = arith.constant dense<0.000000e+00> : vector<128x128xf32>
    %6 = tpu.matmul %5, %3, %cst {dimension_numbers = #tpu.dot_dimension_numbers<[1], [0], [0], [1], [0, 0, 1, 1], [], []>} : vector<128x128xbf16>, vector<128x128xbf16>, vector<128x128xf32> -> vector<128x128xf32>
    %7 = arith.truncf %6 : vector<128x128xf32> to vector<128x128xbf16>
    %cst_7 = arith.constant dense<0.000000e+00> : vector<128x128xf32>
    %8 = tpu.matmul %0, %7, %cst_7 {dimension_numbers = #tpu.dot_dimension_numbers<[1], [0], [0], [1], [0, 0, 1, 1], [], []>} : vector<128x128xbf16>, vector<128x128xbf16>, vector<128x128xf32> -> vector<128x128xf32>
    %9 = vector.broadcast %4 : vector<1x128xf32> to vector<128x128xf32>
    %10 = arith.addf %8, %9 : vector<128x128xf32>
    %cst_8 = arith.constant 0.000000e+00 : f32
    %11 = vector.broadcast %cst_8 : f32 to vector<128x128xf32>
    %12 = arith.maximumf %10, %11 : vector<128x128xf32>
    %c0_9 = arith.constant 0 : index
    %c0_10 = arith.constant 0 : index
    %13 = vector.load %arg4[%c0_9, %c0_10] : memref<128x128xf32, #tpu.memory_space<vmem>>, vector<128x128xf32>
    %14 = arith.truncf %13 : vector<128x128xf32> to vector<128x128xbf16>
    %c0_11 = arith.constant 0 : index
    %c0_12 = arith.constant 0 : index
    %15 = vector.load %arg7[%c0_11, %c0_12] : memref<1x128xf32, #tpu.memory_space<vmem>>, vector<1x128xf32>
    %16 = arith.truncf %12 : vector<128x128xf32> to vector<128x128xbf16>
    %cst_13 = arith.constant dense<0.000000e+00> : vector<128x128xf32>
    %17 = tpu.matmul %16, %14, %cst_13 {dimension_numbers = #tpu.dot_dimension_numbers<[1], [0], [0], [1], [0, 0, 1, 1], [], []>} : vector<128x128xbf16>, vector<128x128xbf16>, vector<128x128xf32> -> vector<128x128xf32>
    %18 = arith.truncf %17 : vector<128x128xf32> to vector<128x128xbf16>
    %cst_14 = arith.constant dense<0.000000e+00> : vector<128x128xf32>
    %19 = tpu.matmul %0, %18, %cst_14 {dimension_numbers = #tpu.dot_dimension_numbers<[1], [0], [0], [1], [0, 0, 1, 1], [], []>} : vector<128x128xbf16>, vector<128x128xbf16>, vector<128x128xf32> -> vector<128x128xf32>
    %20 = vector.broadcast %15 : vector<1x128xf32> to vector<128x128xf32>
    %21 = arith.addf %19, %20 : vector<128x128xf32>
    %cst_15 = arith.constant 0.000000e+00 : f32
    %22 = vector.broadcast %cst_15 : f32 to vector<128x128xf32>
    %23 = arith.maximumf %21, %22 : vector<128x128xf32>
    %c0_16 = arith.constant 0 : index
    %c0_17 = arith.constant 0 : index
    %24 = vector.load %arg5[%c0_16, %c0_17] : memref<128x128xf32, #tpu.memory_space<vmem>>, vector<128x128xf32>
    %25 = arith.truncf %24 : vector<128x128xf32> to vector<128x128xbf16>
    %c0_18 = arith.constant 0 : index
    %c0_19 = arith.constant 0 : index
    %26 = vector.load %arg8[%c0_18, %c0_19] : memref<1x128xf32, #tpu.memory_space<vmem>>, vector<1x128xf32>
    %27 = arith.truncf %23 : vector<128x128xf32> to vector<128x128xbf16>
    %cst_20 = arith.constant dense<0.000000e+00> : vector<128x128xf32>
    %28 = tpu.matmul %27, %25, %cst_20 {dimension_numbers = #tpu.dot_dimension_numbers<[1], [0], [0], [1], [0, 0, 1, 1], [], []>} : vector<128x128xbf16>, vector<128x128xbf16>, vector<128x128xf32> -> vector<128x128xf32>
    %29 = arith.truncf %28 : vector<128x128xf32> to vector<128x128xbf16>
    %cst_21 = arith.constant dense<0.000000e+00> : vector<128x128xf32>
    %30 = tpu.matmul %0, %29, %cst_21 {dimension_numbers = #tpu.dot_dimension_numbers<[1], [0], [0], [1], [0, 0, 1, 1], [], []>} : vector<128x128xbf16>, vector<128x128xbf16>, vector<128x128xf32> -> vector<128x128xf32>
    %31 = vector.broadcast %26 : vector<1x128xf32> to vector<128x128xf32>
    %32 = arith.addf %30, %31 : vector<128x128xf32>
    %c0_22 = arith.constant 0 : index
    %c0_23 = arith.constant 0 : index
    %33 = vector.load %arg9[%c0_22, %c0_23] : memref<128x128xf32, #tpu.memory_space<vmem>>, vector<128x128xf32>
    tpu.vector_store %arg9[%c0_22, %c0_23], %32 {strides = array<i32>} : memref<128x128xf32, #tpu.memory_space<vmem>>, vector<128x128xf32>,
    return
  }
  func.func @transform_0(%arg0: i32) -> (i32, i32) {
    %c0_i32 = arith.constant 0 : i32
    %c0_i32_0 = arith.constant 0 : i32
    %c0_i32_1 = arith.constant 0 : i32
    return %c0_i32, %c0_i32_0 : i32, i32
  }
  func.func @transform_1(%arg0: i32) -> (i32, i32) {
    %c0_i32 = arith.constant 0 : i32
    %c0_i32_0 = arith.constant 0 : i32
    %c0_i32_1 = arith.constant 0 : i32
    return %c0_i32, %c0_i32_0 : i32, i32
  }
  func.func @transform_2(%arg0: i32) -> (i32, i32) {
    %c0_i32 = arith.constant 0 : i32
    %c0_i32_0 = arith.constant 0 : i32
    %c0_i32_1 = arith.constant 0 : i32
    return %c0_i32, %c0_i32_0 : i32, i32
  }
  func.func @transform_3(%arg0: i32) -> (i32, i32) {
    %c0_i32 = arith.constant 0 : i32
    %c0_i32_0 = arith.constant 0 : i32
    %c0_i32_1 = arith.constant 0 : i32
    return %c0_i32, %c0_i32_0 : i32, i32
  }
  func.func @transform_4(%arg0: i32) -> (i32, i32) {
    %c0_i32 = arith.constant 0 : i32
    %c0_i32_0 = arith.constant 0 : i32
    %c0_i32_1 = arith.constant 0 : i32
    return %c0_i32, %c0_i32_0 : i32, i32
  }
  func.func @transform_5(%arg0: i32) -> (i32, i32) {
    %c0_i32 = arith.constant 0 : i32
    %c0_i32_0 = arith.constant 0 : i32
    %c0_i32_1 = arith.constant 0 : i32
    return %c0_i32, %c0_i32_0 : i32, i32
  }
  func.func @transform_6(%arg0: i32) -> (i32, i32) {
    %c0_i32 = arith.constant 0 : i32
    %c0_i32_0 = arith.constant 0 : i32
    %c0_i32_1 = arith.constant 0 : i32
    return %c0_i32, %c0_i32_0 : i32, i32
  }
  func.func @transform_7(%arg0: i32) -> (i32, i32) {
    %c0_i32 = arith.constant 0 : i32
    %c0_i32_0 = arith.constant 0 : i32
    %c0_i32_1 = arith.constant 0 : i32
    return %c0_i32, %c0_i32_0 : i32, i32
  }
  func.func @transform_8(%arg0: i32) -> (i32, i32) {
    %c0_i32 = arith.constant 0 : i32
    %c0_i32_0 = arith.constant 0 : i32
    %c0_i32_1 = arith.constant 0 : i32
    return %c0_i32, %c0_i32_0 : i32, i32
  }
}

</mosaic_0001>

<llo_original>
// kernel: tpu_custom_call.1
$region0: #{tpu_custom_call.1}
  #allocation0 [shape = 'u32[]', space=smem, size = 0x4, offset = 0x4, fixed_abs, tag = 'smem constant byte address 0x4 - core index']
  #allocation1 [shape = 'u32[144,128]{1,0:T(1,128)}', space=vmem, size = 0x12000, scoped, tag = 'internal scratch']
  %s0 = inlined_call_operand.hbm [shape: bf16[128,128], index: 0, kind: input, shape index: {}]
  %s1 = inlined_call_operand.hbm [shape: f32[128,128], index: 1, kind: input, shape index: {}]
  %s2 = inlined_call_operand.hbm [shape: f32[128,128], index: 2, kind: input, shape index: {}]
  %s3 = inlined_call_operand.hbm [shape: f32[128,128], index: 3, kind: input, shape index: {}]
  %s4 = inlined_call_operand.hbm [shape: f32[128,128], index: 4, kind: input, shape index: {}]
  %s5 = inlined_call_operand.vmem [shape: f32[1,128], index: 5, kind: input, shape index: {}]
  %s6 = inlined_call_operand.vmem [shape: f32[1,128], index: 6, kind: input, shape index: {}]
  %s7 = inlined_call_operand.vmem [shape: f32[1,128], index: 7, kind: input, shape index: {}]
  %s8 = inlined_call_operand.hbm [shape: f32[128,128], index: 8, kind: output, shape index: {}]
  %s9 = sld [smem:[#allocation0]]
  $region62: #{tpu_custom_call.1} parent=0
    _
  %s11 = ssub.s32 1, %s9
  %s12 = scalar_select 0, %s11, %s9
  $region1: #{tpu_custom_call.1} parent=0
    #allocation2 [shape = 'u8[32768]{0}', space=vmem, size = 0x8000, scoped, tag = 'input window, operand 0, single buffered']
    #allocation3 [shape = 's32[1]{0}', space=sflag, size = 0x4, scoped, tag = 'scoped memory for tpu_custom_call.1']
    #allocation4 [shape = 's32[1]{0}', space=sflag, size = 0x4, scoped, tag = 'scoped memory for tpu_custom_call.1']
    #allocation5 [shape = 'u8[65536]{0}', space=vmem, size = 0x10000, scoped, tag = 'input window, operand 1, single buffered']
    #allocation6 [shape = 's32[1]{0}', space=sflag, size = 0x4, scoped, tag = 'scoped memory for tpu_custom_call.1']
    #allocation7 [shape = 'u8[65536]{0}', space=vmem, size = 0x10000, scoped, tag = 'input window, operand 2, single buffered']
    #allocation8 [shape = 'u8[65536]{0}', space=vmem, size = 0x10000, scoped, tag = 'input window, operand 3, single buffered']
    #allocation9 [shape = 's32[1]{0}', space=sflag, size = 0x4, scoped, tag = 'scoped memory for tpu_custom_call.1']
    #allocation10 [shape = 'u8[65536]{0}', space=vmem, size = 0x10000, scoped, tag = 'input window, operand 4, single buffered']
    #allocation11 [shape = 'u8[65536]{0}', space=vmem, size = 0x10000, scoped, tag = 'output window, operand 0, single buffered']
    %13 = vsyncpa [#allocation3], 0
    %14 = vsyncpa [#allocation6], 0
    %15 = vsyncpa [#allocation9], 0
    %16 = vsyncpa [#allocation4], 0
    // Predicated region
    $region2: #{tpu_custom_call.1} parent=1 // pred_check
      _
    $region3: #{tpu_custom_call.1} parent=1 // pred_check_branch
      %18 = sbr.rel (0) target = $region5
    $region4: #{tpu_custom_call.1} parent=1 // pred_region
      %s20 = ssub.s32 1024, 1024
      %21 = vsyncadd [#allocation3], %s20
      %s22 = sshll.u32 [#allocation2], 4
      %s23 = int_to_ptr.vmem [resolvable:$true] %s22
      %28 = dma.hbm_to_vmem [thread:$0]  %s0, 1024, %s23, [#allocation3], 64, 64, 4
    $region5: #{tpu_custom_call.1} parent=1 // pred_fallthru
      _
    // Predicated region
    $region6: #{tpu_custom_call.1} parent=1 // pred_check
      _
    $region7: #{tpu_custom_call.1} parent=1 // pred_check_branch
      %30 = sbr.rel (0) target = $region9
    $region8: #{tpu_custom_call.1} parent=1 // pred_region
      %s32 = ssub.s32 2048, 2048
      %33 = vsyncadd [#allocation6], %s32
      %s34 = sshll.u32 [#allocation5], 4
      %s35 = int_to_ptr.vmem [resolvable:$true] %s34
      %40 = dma.hbm_to_vmem [thread:$0]  %s1, 2048, %s35, [#allocation6], 128, 128, 8
    $region9: #{tpu_custom_call.1} parent=1 // pred_fallthru
      _
    // Predicated region
    $region10: #{tpu_custom_call.1} parent=1 // pred_check
      _
    $region11: #{tpu_custom_call.1} parent=1 // pred_check_branch
      %42 = sbr.rel (0) target = $region13
    $region12: #{tpu_custom_call.1} parent=1 // pred_region
      %s44 = ssub.s32 2048, 2048
      %45 = vsyncadd [#allocation6], %s44
      %s46 = sshll.u32 [#allocation7], 4
      %s47 = int_to_ptr.vmem [resolvable:$true] %s46
      %52 = dma.hbm_to_vmem [thread:$0]  %s2, 2048, %s47, [#allocation6], 128, 128, 8
    $region13: #{tpu_custom_call.1} parent=1 // pred_fallthru
      _
    // Predicated region
    $region14: #{tpu_custom_call.1} parent=1 // pred_check
      _
    $region15: #{tpu_custom_call.1} parent=1 // pred_check_branch
      %54 = sbr.rel (0) target = $region17
    $region16: #{tpu_custom_call.1} parent=1 // pred_region
      %s56 = ssub.s32 2048, 2048
      %57 = vsyncadd [#allocation9], %s56
      %s58 = sshll.u32 [#allocation8], 4
      %s59 = int_to_ptr.vmem [resolvable:$true] %s58
      %64 = dma.hbm_to_vmem [thread:$0]  %s3, 2048, %s59, [#allocation9], 128, 128, 8
    $region17: #{tpu_custom_call.1} parent=1 // pred_fallthru
      _
    // Predicated region
    $region18: #{tpu_custom_call.1} parent=1 // pred_check
      _
    $region19: #{tpu_custom_call.1} parent=1 // pred_check_branch
      %66 = sbr.rel (0) target = $region21
    $region20: #{tpu_custom_call.1} parent=1 // pred_region
      %s68 = ssub.s32 2048, 2048
      %69 = vsyncadd [#allocation9], %s68
      %s70 = sshll.u32 [#allocation10], 4
      %s71 = int_to_ptr.vmem [resolvable:$true] %s70
      %76 = dma.hbm_to_vmem [thread:$0]  %s4, 2048, %s71, [#allocation9], 128, 128, 8
    $region21: #{tpu_custom_call.1} parent=1 // pred_fallthru
      _
    // Predicated region
    $region22: #{tpu_custom_call.1} parent=1 // pred_check
      _
    $region23: #{tpu_custom_call.1} parent=1 // pred_check_branch
      %78 = sbr.rel (0) target = $region25
    $region24: #{tpu_custom_call.1} parent=1 // pred_region
      _
    $region25: #{tpu_custom_call.1} parent=1 // pred_fallthru
      _
    // Predicated region
    $region26: #{tpu_custom_call.1} parent=1 // pred_check
      _
    $region27: #{tpu_custom_call.1} parent=1 // pred_check_branch
      %80 = sbr.rel (0) target = $region29
    $region28: #{tpu_custom_call.1} parent=1 // pred_region
      _
    $region29: #{tpu_custom_call.1} parent=1 // pred_fallthru
      _
    // Predicated region
    $region30: #{tpu_custom_call.1} parent=1 // pred_check
      _
    $region31: #{tpu_custom_call.1} parent=1 // pred_check_branch
      %82 = sbr.rel (0) target = $region33
    $region32: #{tpu_custom_call.1} parent=1 // pred_region
      _
    $region33: #{tpu_custom_call.1} parent=1 // pred_fallthru
      _
    // Predicated region
    $region34: #{tpu_custom_call.1} parent=1 // pred_check
      _
    $region35: #{tpu_custom_call.1} parent=1 // pred_check_branch
      %84 = sbr.rel (0) target = $region37
    $region36: #{tpu_custom_call.1} parent=1 // pred_region
      %85 = dma.done [#allocation3], 1024
    $region37: #{tpu_custom_call.1} parent=1 // pred_fallthru
      _
    // Predicated region
    $region38: #{tpu_custom_call.1} parent=1 // pred_check
      _
    $region39: #{tpu_custom_call.1} parent=1 // pred_check_branch
      %87 = sbr.rel (0) target = $region41
    $region40: #{tpu_custom_call.1} parent=1 // pred_region
      %88 = dma.done [#allocation6], 2048
    $region41: #{tpu_custom_call.1} parent=1 // pred_fallthru
      _
    // Predicated region
    $region42: #{tpu_custom_call.1} parent=1 // pred_check
      _
    $region43: #{tpu_custom_call.1} parent=1 // pred_check_branch
      %90 = sbr.rel (0) target = $region45
    $region44: #{tpu_custom_call.1} parent=1 // pred_region
      %91 = dma.done [#allocation6], 2048
    $region45: #{tpu_custom_call.1} parent=1 // pred_fallthru
      _
    // Predicated region
    $region46: #{tpu_custom_call.1} parent=1 // pred_check
      _
    $region47: #{tpu_custom_call.1} parent=1 // pred_check_branch
      %93 = sbr.rel (0) target = $region49
    $region48: #{tpu_custom_call.1} parent=1 // pred_region
      %94 = dma.done [#allocation9], 2048
    $region49: #{tpu_custom_call.1} parent=1 // pred_fallthru
      _
    // Predicated region
    $region50: #{tpu_custom_call.1} parent=1 // pred_check
      _
    $region51: #{tpu_custom_call.1} parent=1 // pred_check_branch
      %96 = sbr.rel (0) target = $region53
    $region52: #{tpu_custom_call.1} parent=1 // pred_region
      %97 = dma.done [#allocation9], 2048
    $region53: #{tpu_custom_call.1} parent=1 // pred_fallthru
      _
    %v99 = vld [vmem:[#allocation2] sm:$0xf]
    %v100 = vld [vmem:[#allocation2 + $0x4] sm:$0xf]
    %v101 = vld [vmem:[#allocation2 + $0x8] sm:$0xf]
    %v102 = vld [vmem:[#allocation2 + $0xc] sm:$0xf]
    %v103 = vld [vmem:[#allocation2 + $0x10] sm:$0xf]
    %v104 = vld [vmem:[#allocation2 + $0x14] sm:$0xf]
    %v105 = vld [vmem:[#allocation2 + $0x18] sm:$0xf]
    %v106 = vld [vmem:[#allocation2 + $0x1c] sm:$0xf]
    %v107 = vld [vmem:[#allocation2 + $0x20] sm:$0xf]
    %v108 = vld [vmem:[#allocation2 + $0x24] sm:$0xf]
    %v109 = vld [vmem:[#allocation2 + $0x28] sm:$0xf]
    %v110 = vld [vmem:[#allocation2 + $0x2c] sm:$0xf]
    %v111 = vld [vmem:[#allocation2 + $0x30] sm:$0xf]
    %v112 = vld [vmem:[#allocation2 + $0x34] sm:$0xf]
    %v113 = vld [vmem:[#allocation2 + $0x38] sm:$0xf]
    %v114 = vld [vmem:[#allocation2 + $0x3c] sm:$0xf]
    %v115 = vld [vmem:[#allocation5] sm:$0xff]
    %v116 = vld [vmem:[#allocation5 + $0x8] sm:$0xff]
    %v117 = vld [vmem:[#allocation5 + $0x10] sm:$0xff]
    %v118 = vld [vmem:[#allocation5 + $0x18] sm:$0xff]
    %v119 = vld [vmem:[#allocation5 + $0x20] sm:$0xff]
    %v120 = vld [vmem:[#allocation5 + $0x28] sm:$0xff]
    %v121 = vld [vmem:[#allocation5 + $0x30] sm:$0xff]
    %v122 = vld [vmem:[#allocation5 + $0x38] sm:$0xff]
    %v123 = vld [vmem:[#allocation5 + $0x40] sm:$0xff]
    %v124 = vld [vmem:[#allocation5 + $0x48] sm:$0xff]
    %v125 = vld [vmem:[#allocation5 + $0x50] sm:$0xff]
    %v126 = vld [vmem:[#allocation5 + $0x58] sm:$0xff]
    %v127 = vld [vmem:[#allocation5 + $0x60] sm:$0xff]
    %v128 = vld [vmem:[#allocation5 + $0x68] sm:$0xff]
    %v129 = vld [vmem:[#allocation5 + $0x70] sm:$0xff]
    %v130 = vld [vmem:[#allocation5 + $0x78] sm:$0xff]
    %v131 = vld [vmem:[#allocation7] sm:$0xff]
    %v132 = vld [vmem:[#allocation7 + $0x8] sm:$0xff]
    %v133 = vld [vmem:[#allocation7 + $0x10] sm:$0xff]
    %v134 = vld [vmem:[#allocation7 + $0x18] sm:$0xff]
    %v135 = vld [vmem:[#allocation7 + $0x20] sm:$0xff]
    %v136 = vld [vmem:[#allocation7 + $0x28] sm:$0xff]
    %v137 = vld [vmem:[#allocation7 + $0x30] sm:$0xff]
    %v138 = vld [vmem:[#allocation7 + $0x38] sm:$0xff]
    %v139 = vld [vmem:[#allocation7 + $0x40] sm:$0xff]
    %v140 = vld [vmem:[#allocation7 + $0x48] sm:$0xff]
    %v141 = vld [vmem:[#allocation7 + $0x50] sm:$0xff]
    %v142 = vld [vmem:[#allocation7 + $0x58] sm:$0xff]
    %v143 = vld [vmem:[#allocation7 + $0x60] sm:$0xff]
    %v144 = vld [vmem:[#allocation7 + $0x68] sm:$0xff]
    %v145 = vld [vmem:[#allocation7 + $0x70] sm:$0xff]
    %v146 = vld [vmem:[#allocation7 + $0x78] sm:$0xff]
    %v147 = vpack.c.bf16 %v132, %v131
    %v148 = vpack.c.bf16 %v134, %v133
    %v149 = vpack.c.bf16 %v136, %v135
    %v150 = vpack.c.bf16 %v138, %v137
    %v151 = vpack.c.bf16 %v140, %v139
    %v152 = vpack.c.bf16 %v142, %v141
    %v153 = vpack.c.bf16 %v144, %v143
    %v154 = vpack.c.bf16 %v146, %v145
    %v155 = vld [vmem:[%s5] sm:$0x1]
    %v156 = vpack.c.bf16 %v116, %v115
    %v157 = vpack.c.bf16 %v118, %v117
    %v158 = vpack.c.bf16 %v120, %v119
    %v159 = vpack.c.bf16 %v122, %v121
    %v160 = vpack.c.bf16 %v124, %v123
    %v161 = vpack.c.bf16 %v126, %v125
    %v162 = vpack.c.bf16 %v128, %v127
    %v163 = vpack.c.bf16 %v130, %v129
    %164 = vmatprep.subr.bf16.mxu0 0
    %165 = vmatpush1.bf16.msra.mxu0 %v147
    %166 = vmatprep.subr.bf16.mxu0 0
    %167 = vmatpush1.bf16.msra.mxu0 %v148
    %168 = vmatprep.subr.bf16.mxu0 0
    %169 = vmatpush1.bf16.msra.mxu0 %v149
    %170 = vmatprep.subr.bf16.mxu0 0
    %171 = vmatpush1.bf16.msra.mxu0 %v150
    %172 = vmatprep.subr.bf16.mxu0 0
    %173 = vmatpush1.bf16.msra.mxu0 %v151
    %174 = vmatprep.subr.bf16.mxu0 0
    %175 = vmatpush1.bf16.msra.mxu0 %v152
    %176 = vmatprep.subr.bf16.mxu0 0
    %177 = vmatpush1.bf16.msra.mxu0 %v153
    %178 = vmatprep.subr.bf16.mxu0 0
    %179 = vmatpush1.bf16.msra.mxu0 %v154
    %180 = vmatprep.subr.bf16.mxu0 0
    %181 = vmatpush1.bf16.msra.mxu0 0
    %182 = vmatprep.subr.bf16.mxu0 0
    %183 = vmatpush1.bf16.msra.mxu0 0
    %184 = vmatprep.subr.bf16.mxu0 0
    %185 = vmatpush1.bf16.msra.mxu0 0
    %186 = vmatprep.subr.bf16.mxu0 0
    %187 = vmatpush1.bf16.msra.mxu0 0
    %188 = vmatprep.subr.bf16.mxu0 0
    %189 = vmatpush1.bf16.msra.mxu0 0
    %190 = vmatprep.subr.bf16.mxu0 0
    %191 = vmatpush1.bf16.msra.mxu0 0
    %192 = vmatprep.subr.bf16.mxu0 0
    %193 = vmatpush1.bf16.msra.mxu0 0
    %194 = vmatprep.subr.bf16.mxu0 0
    %195 = vmatpush1.bf16.msra.mxu0 0
    %196 = vmatprep.mubr.bf16.mxu0 0
    %197 = vmatmul.mubr.bf16.gmra.mrb[0].mxu0 %v156
    %v198 = vpop.f32.mrb[0].mxu0
    %v199 = vadd.f32 0.0, %v198
    %v200 = vpop.f32.mrb[0].mxu0
    %v201 = vpop.f32.mrb[0].mxu0
    %v202 = vadd.f32 0.0, %v201
    %v203 = vpop.f32.mrb[0].mxu0
    %204 = vmatprep.mubr.bf16.mxu0 0
    %205 = vmatmul.mubr.bf16.gmra.mrb[0].mxu0 %v157
    %v206 = vpop.f32.mrb[0].mxu0
    %v207 = vadd.f32 0.0, %v206
    %v208 = vpop.f32.mrb[0].mxu0
    %v209 = vpop.f32.mrb[0].mxu0
    %v210 = vadd.f32 0.0, %v209
    %v211 = vpop.f32.mrb[0].mxu0
    %212 = vmatprep.mubr.bf16.mxu0 0
    %213 = vmatmul.mubr.bf16.gmra.mrb[0].mxu0 %v158
    %v214 = vpop.f32.mrb[0].mxu0
    %v215 = vadd.f32 0.0, %v214
    %v216 = vpop.f32.mrb[0].mxu0
    %v217 = vpop.f32.mrb[0].mxu0
    %v218 = vadd.f32 0.0, %v217
    %v219 = vpop.f32.mrb[0].mxu0
    %220 = vmatprep.mubr.bf16.mxu0 0
    %221 = vmatmul.mubr.bf16.gmra.mrb[0].mxu0 %v159
    %v222 = vpop.f32.mrb[0].mxu0
    %v223 = vadd.f32 0.0, %v222
    %v224 = vpop.f32.mrb[0].mxu0
    %v225 = vpop.f32.mrb[0].mxu0
    %v226 = vadd.f32 0.0, %v225
    %v227 = vpop.f32.mrb[0].mxu0
    %228 = vmatprep.mubr.bf16.mxu0 0
    %229 = vmatmul.mubr.bf16.gmra.mrb[0].mxu0 %v160
    %v230 = vpop.f32.mrb[0].mxu0
    %v231 = vadd.f32 0.0, %v230
    %v232 = vpop.f32.mrb[0].mxu0
    %v233 = vpop.f32.mrb[0].mxu0
    %v234 = vadd.f32 0.0, %v233
    %v235 = vpop.f32.mrb[0].mxu0
    %236 = vmatprep.mubr.bf16.mxu0 0
    %237 = vmatmul.mubr.bf16.gmra.mrb[0].mxu0 %v161
    %v238 = vpop.f32.mrb[0].mxu0
    %v239 = vadd.f32 0.0, %v238
    %v240 = vpop.f32.mrb[0].mxu0
    %v241 = vpop.f32.mrb[0].mxu0
    %v242 = vadd.f32 0.0, %v241
    %v243 = vpop.f32.mrb[0].mxu0
    %244 = vmatprep.mubr.bf16.mxu0 0
    %245 = vmatmul.mubr.bf16.gmra.mrb[0].mxu0 %v162
    %v246 = vpop.f32.mrb[0].mxu0
    %v247 = vadd.f32 0.0, %v246
    %v248 = vpop.f32.mrb[0].mxu0
    %v249 = vpop.f32.mrb[0].mxu0
    %v250 = vadd.f32 0.0, %v249
    %v251 = vpop.f32.mrb[0].mxu0
    %252 = vmatprep.mubr.bf16.mxu0 0
    %253 = vmatmul.mubr.bf16.gmra.mrb[0].mxu0 %v163
    %v254 = vpop.f32.mrb[0].mxu0
    %v255 = vadd.f32 0.0, %v254
    %v256 = vpop.f32.mrb[0].mxu0
    %v257 = vpop.f32.mrb[0].mxu0
    %v258 = vadd.f32 0.0, %v257
    %v259 = vpop.f32.mrb[0].mxu0
    %260 = vdwg.mxu0
    %v261 = vpack.c.bf16 %v202, %v199
    %v262 = vpack.c.bf16 %v210, %v207
    %v263 = vpack.c.bf16 %v218, %v215
    %v264 = vpack.c.bf16 %v226, %v223
    %v265 = vpack.c.bf16 %v234, %v231
    %v266 = vpack.c.bf16 %v242, %v239
    %v267 = vpack.c.bf16 %v250, %v247
    %v268 = vpack.c.bf16 %v258, %v255
    %v270 = vlaneseq
    %v271 = vshrl.u32 %v270, 7
    %v272 = vsub.s32 0, %v271
    %v273 = vrot.slane %v155, %v272
    %v291 = vunpack.c.l.b16 %v99
    %v292 = vunpack.c.l.b16 %v100
    %v293 = vunpack.c.l.b16 %v101
    %v294 = vunpack.c.l.b16 %v102
    %v295 = vunpack.c.l.b16 %v103
    %v296 = vunpack.c.l.b16 %v104
    %v297 = vunpack.c.l.b16 %v105
    %v298 = vunpack.c.l.b16 %v106
    %v299 = vunpack.c.l.b16 %v107
    %v300 = vunpack.c.l.b16 %v108
    %v301 = vunpack.c.l.b16 %v109
    %v302 = vunpack.c.l.b16 %v110
    %v303 = vunpack.c.l.b16 %v111
    %v304 = vunpack.c.l.b16 %v112
    %v305 = vunpack.c.l.b16 %v113
    %v306 = vunpack.c.l.b16 %v114
    %v307 = vpack.c.b16 %v292, %v291
    %v308 = vpack.c.b16 %v294, %v293
    %v309 = vpack.c.b16 %v296, %v295
    %v310 = vpack.c.b16 %v298, %v297
    %v311 = vpack.c.b16 %v300, %v299
    %v312 = vpack.c.b16 %v302, %v301
    %v313 = vpack.c.b16 %v304, %v303
    %v314 = vpack.c.b16 %v306, %v305
    %323 = vmatprep.subr.bf16.mxu0 0
    %324 = vmatpush1.bf16.msra.mxu0 %v261
    %325 = vmatprep.subr.bf16.mxu0 0
    %326 = vmatpush1.bf16.msra.mxu0 %v262
    %327 = vmatprep.subr.bf16.mxu0 0
    %328 = vmatpush1.bf16.msra.mxu0 %v263
    %329 = vmatprep.subr.bf16.mxu0 0
    %330 = vmatpush1.bf16.msra.mxu0 %v264
    %331 = vmatprep.subr.bf16.mxu0 0
    %332 = vmatpush1.bf16.msra.mxu0 %v265
    %333 = vmatprep.subr.bf16.mxu0 0
    %334 = vmatpush1.bf16.msra.mxu0 %v266
    %335 = vmatprep.subr.bf16.mxu0 0
    %336 = vmatpush1.bf16.msra.mxu0 %v267
    %337 = vmatprep.subr.bf16.mxu0 0
    %338 = vmatpush1.bf16.msra.mxu0 %v268
    %339 = vmatprep.subr.bf16.mxu0 0
    %340 = vmatpush1.bf16.msra.mxu0 0
    %341 = vmatprep.subr.bf16.mxu0 0
    %342 = vmatpush1.bf16.msra.mxu0 0
    %343 = vmatprep.subr.bf16.mxu0 0
    %344 = vmatpush1.bf16.msra.mxu0 0
    %345 = vmatprep.subr.bf16.mxu0 0
    %346 = vmatpush1.bf16.msra.mxu0 0
    %347 = vmatprep.subr.bf16.mxu0 0
    %348 = vmatpush1.bf16.msra.mxu0 0
    %349 = vmatprep.subr.bf16.mxu0 0
    %350 = vmatpush1.bf16.msra.mxu0 0
    %351 = vmatprep.subr.bf16.mxu0 0
    %352 = vmatpush1.bf16.msra.mxu0 0
    %353 = vmatprep.subr.bf16.mxu0 0
    %354 = vmatpush1.bf16.msra.mxu0 0
    %355 = vmatprep.mubr.bf16.mxu0 0
    %356 = vmatmul.mubr.bf16.gmra.mrb[0].mxu0 %v307
    %v357 = vpop.f32.mrb[0].mxu0
    %v358 = vadd.f32 %v273, %v357
    %v359 = vpop.f32.mrb[0].mxu0
    %v360 = vpop.f32.mrb[0].mxu0
    %v361 = vadd.f32 %v273, %v360
    %v362 = vpop.f32.mrb[0].mxu0
    %363 = vmatprep.mubr.bf16.mxu0 0
    %364 = vmatmul.mubr.bf16.gmra.mrb[0].mxu0 %v308
    %v365 = vpop.f32.mrb[0].mxu0
    %v366 = vadd.f32 %v273, %v365
    %v367 = vpop.f32.mrb[0].mxu0
    %v368 = vpop.f32.mrb[0].mxu0
    %v369 = vadd.f32 %v273, %v368
    %v370 = vpop.f32.mrb[0].mxu0
    %371 = vmatprep.mubr.bf16.mxu0 0
    %372 = vmatmul.mubr.bf16.gmra.mrb[0].mxu0 %v309
    %v373 = vpop.f32.mrb[0].mxu0
    %v374 = vadd.f32 %v273, %v373
    %v375 = vpop.f32.mrb[0].mxu0
    %v376 = vpop.f32.mrb[0].mxu0
    %v377 = vadd.f32 %v273, %v376
    %v378 = vpop.f32.mrb[0].mxu0
    %379 = vmatprep.mubr.bf16.mxu0 0
    %380 = vmatmul.mubr.bf16.gmra.mrb[0].mxu0 %v310
    %v381 = vpop.f32.mrb[0].mxu0
    %v382 = vadd.f32 %v273, %v381
    %v383 = vpop.f32.mrb[0].mxu0
    %v384 = vpop.f32.mrb[0].mxu0
    %v385 = vadd.f32 %v273, %v384
    %v386 = vpop.f32.mrb[0].mxu0
    %387 = vmatprep.mubr.bf16.mxu0 0
    %388 = vmatmul.mubr.bf16.gmra.mrb[0].mxu0 %v311
    %v389 = vpop.f32.mrb[0].mxu0
    %v390 = vadd.f32 %v273, %v389
    %v391 = vpop.f32.mrb[0].mxu0
    %v392 = vpop.f32.mrb[0].mxu0
    %v393 = vadd.f32 %v273, %v392
    %v394 = vpop.f32.mrb[0].mxu0
    %395 = vmatprep.mubr.bf16.mxu0 0
    %396 = vmatmul.mubr.bf16.gmra.mrb[0].mxu0 %v312
    %v397 = vpop.f32.mrb[0].mxu0
    %v398 = vadd.f32 %v273, %v397
    %v399 = vpop.f32.mrb[0].mxu0
    %v400 = vpop.f32.mrb[0].mxu0
    %v401 = vadd.f32 %v273, %v400
    %v402 = vpop.f32.mrb[0].mxu0
    %403 = vmatprep.mubr.bf16.mxu0 0
    %404 = vmatmul.mubr.bf16.gmra.mrb[0].mxu0 %v313
    %v405 = vpop.f32.mrb[0].mxu0
    %v406 = vadd.f32 %v273, %v405
    %v407 = vpop.f32.mrb[0].mxu0
    %v408 = vpop.f32.mrb[0].mxu0
    %v409 = vadd.f32 %v273, %v408
    %v410 = vpop.f32.mrb[0].mxu0
    %411 = vmatprep.mubr.bf16.mxu0 0
    %412 = vmatmul.mubr.bf16.gmra.mrb[0].mxu0 %v314
    %v413 = vpop.f32.mrb[0].mxu0
    %v414 = vadd.f32 %v273, %v413
    %v415 = vpop.f32.mrb[0].mxu0
    %v416 = vpop.f32.mrb[0].mxu0
    %v417 = vadd.f32 %v273, %v416
    %v418 = vpop.f32.mrb[0].mxu0
    %419 = vdwg.mxu0
    %v420 = vmax.f32 %v358, 0.0
    %v421 = vmax.f32 %v361, 0.0
    %v422 = vmax.f32 %v366, 0.0
    %v423 = vmax.f32 %v369, 0.0
    %v424 = vmax.f32 %v374, 0.0
    %v425 = vmax.f32 %v377, 0.0
    %v426 = vmax.f32 %v382, 0.0
    %v427 = vmax.f32 %v385, 0.0
    %v428 = vmax.f32 %v390, 0.0
    %v429 = vmax.f32 %v393, 0.0
    %v430 = vmax.f32 %v398, 0.0
    %v431 = vmax.f32 %v401, 0.0
    %v432 = vmax.f32 %v406, 0.0
    %v433 = vmax.f32 %v409, 0.0
    %v434 = vmax.f32 %v414, 0.0
    %v435 = vmax.f32 %v417, 0.0
    %v436 = vld [vmem:[#allocation8] sm:$0xff]
    %v437 = vld [vmem:[#allocation8 + $0x8] sm:$0xff]
    %v438 = vld [vmem:[#allocation8 + $0x10] sm:$0xff]
    %v439 = vld [vmem:[#allocation8 + $0x18] sm:$0xff]
    %v440 = vld [vmem:[#allocation8 + $0x20] sm:$0xff]
    %v441 = vld [vmem:[#allocation8 + $0x28] sm:$0xff]
    %v442 = vld [vmem:[#allocation8 + $0x30] sm:$0xff]
    %v443 = vld [vmem:[#allocation8 + $0x38] sm:$0xff]
    %v444 = vld [vmem:[#allocation8 + $0x40] sm:$0xff]
    %v445 = vld [vmem:[#allocation8 + $0x48] sm:$0xff]
    %v446 = vld [vmem:[#allocation8 + $0x50] sm:$0xff]
    %v447 = vld [vmem:[#allocation8 + $0x58] sm:$0xff]
    %v448 = vld [vmem:[#allocation8 + $0x60] sm:$0xff]
    %v449 = vld [vmem:[#allocation8 + $0x68] sm:$0xff]
    %v450 = vld [vmem:[#allocation8 + $0x70] sm:$0xff]
    %v451 = vld [vmem:[#allocation8 + $0x78] sm:$0xff]
    %v452 = vpack.c.bf16 %v437, %v436
    %v453 = vpack.c.bf16 %v439, %v438
    %v454 = vpack.c.bf16 %v441, %v440
    %v455 = vpack.c.bf16 %v443, %v442
    %v456 = vpack.c.bf16 %v445, %v444
    %v457 = vpack.c.bf16 %v447, %v446
    %v458 = vpack.c.bf16 %v449, %v448
    %v459 = vpack.c.bf16 %v451, %v450
    %v460 = vld [vmem:[%s6] sm:$0x1]
    %v461 = vpack.c.bf16 %v421, %v420
    %v462 = vpack.c.bf16 %v423, %v422
    %v463 = vpack.c.bf16 %v425, %v424
    %v464 = vpack.c.bf16 %v427, %v426
    %v465 = vpack.c.bf16 %v429, %v428
    %v466 = vpack.c.bf16 %v431, %v430
    %v467 = vpack.c.bf16 %v433, %v432
    %v468 = vpack.c.bf16 %v435, %v434
    %469 = vmatprep.subr.bf16.mxu0 0
    %470 = vmatpush1.bf16.msra.mxu0 %v452
    %471 = vmatprep.subr.bf16.mxu0 0
    %472 = vmatpush1.bf16.msra.mxu0 %v453
    %473 = vmatprep.subr.bf16.mxu0 0
    %474 = vmatpush1.bf16.msra.mxu0 %v454
    %475 = vmatprep.subr.bf16.mxu0 0
    %476 = vmatpush1.bf16.msra.mxu0 %v455
    %477 = vmatprep.subr.bf16.mxu0 0
    %478 = vmatpush1.bf16.msra.mxu0 %v456
    %479 = vmatprep.subr.bf16.mxu0 0
    %480 = vmatpush1.bf16.msra.mxu0 %v457
    %481 = vmatprep.subr.bf16.mxu0 0
    %482 = vmatpush1.bf16.msra.mxu0 %v458
    %483 = vmatprep.subr.bf16.mxu0 0
    %484 = vmatpush1.bf16.msra.mxu0 %v459
    %485 = vmatprep.subr.bf16.mxu0 0
    %486 = vmatpush1.bf16.msra.mxu0 0
    %487 = vmatprep.subr.bf16.mxu0 0
    %488 = vmatpush1.bf16.msra.mxu0 0
    %489 = vmatprep.subr.bf16.mxu0 0
    %490 = vmatpush1.bf16.msra.mxu0 0
    %491 = vmatprep.subr.bf16.mxu0 0
    %492 = vmatpush1.bf16.msra.mxu0 0
    %493 = vmatprep.subr.bf16.mxu0 0
    %494 = vmatpush1.bf16.msra.mxu0 0
    %495 = vmatprep.subr.bf16.mxu0 0
    %496 = vmatpush1.bf16.msra.mxu0 0
    %497 = vmatprep.subr.bf16.mxu0 0
    %498 = vmatpush1.bf16.msra.mxu0 0
    %499 = vmatprep.subr.bf16.mxu0 0
    %500 = vmatpush1.bf16.msra.mxu0 0
    %501 = vmatprep.mubr.bf16.mxu0 0
    %502 = vmatmul.mubr.bf16.gmra.mrb[0].mxu0 %v461
    %v503 = vpop.f32.mrb[0].mxu0
    %v504 = vadd.f32 0.0, %v503
    %v505 = vpop.f32.mrb[0].mxu0
    %v506 = vpop.f32.mrb[0].mxu0
    %v507 = vadd.f32 0.0, %v506
    %v508 = vpop.f32.mrb[0].mxu0
    %509 = vmatprep.mubr.bf16.mxu0 0
    %510 = vmatmul.mubr.bf16.gmra.mrb[0].mxu0 %v462
    %v511 = vpop.f32.mrb[0].mxu0
    %v512 = vadd.f32 0.0, %v511
    %v513 = vpop.f32.mrb[0].mxu0
    %v514 = vpop.f32.mrb[0].mxu0
    %v515 = vadd.f32 0.0, %v514
    %v516 = vpop.f32.mrb[0].mxu0
    %517 = vmatprep.mubr.bf16.mxu0 0
    %518 = vmatmul.mubr.bf16.gmra.mrb[0].mxu0 %v463
    %v519 = vpop.f32.mrb[0].mxu0
    %v520 = vadd.f32 0.0, %v519
    %v521 = vpop.f32.mrb[0].mxu0
    %v522 = vpop.f32.mrb[0].mxu0
    %v523 = vadd.f32 0.0, %v522
    %v524 = vpop.f32.mrb[0].mxu0
    %525 = vmatprep.mubr.bf16.mxu0 0
    %526 = vmatmul.mubr.bf16.gmra.mrb[0].mxu0 %v464
    %v527 = vpop.f32.mrb[0].mxu0
    %v528 = vadd.f32 0.0, %v527
    %v529 = vpop.f32.mrb[0].mxu0
    %v530 = vpop.f32.mrb[0].mxu0
    %v531 = vadd.f32 0.0, %v530
    %v532 = vpop.f32.mrb[0].mxu0
    %533 = vmatprep.mubr.bf16.mxu0 0
    %534 = vmatmul.mubr.bf16.gmra.mrb[0].mxu0 %v465
    %v535 = vpop.f32.mrb[0].mxu0
    %v536 = vadd.f32 0.0, %v535
    %v537 = vpop.f32.mrb[0].mxu0
    %v538 = vpop.f32.mrb[0].mxu0
    %v539 = vadd.f32 0.0, %v538
    %v540 = vpop.f32.mrb[0].mxu0
    %541 = vmatprep.mubr.bf16.mxu0 0
    %542 = vmatmul.mubr.bf16.gmra.mrb[0].mxu0 %v466
    %v543 = vpop.f32.mrb[0].mxu0
    %v544 = vadd.f32 0.0, %v543
    %v545 = vpop.f32.mrb[0].mxu0
    %v546 = vpop.f32.mrb[0].mxu0
    %v547 = vadd.f32 0.0, %v546
    %v548 = vpop.f32.mrb[0].mxu0
    %549 = vmatprep.mubr.bf16.mxu0 0
    %550 = vmatmul.mubr.bf16.gmra.mrb[0].mxu0 %v467
    %v551 = vpop.f32.mrb[0].mxu0
    %v552 = vadd.f32 0.0, %v551
    %v553 = vpop.f32.mrb[0].mxu0
    %v554 = vpop.f32.mrb[0].mxu0
    %v555 = vadd.f32 0.0, %v554
    %v556 = vpop.f32.mrb[0].mxu0
    %557 = vmatprep.mubr.bf16.mxu0 0
    %558 = vmatmul.mubr.bf16.gmra.mrb[0].mxu0 %v468
    %v559 = vpop.f32.mrb[0].mxu0
    %v560 = vadd.f32 0.0, %v559
    %v561 = vpop.f32.mrb[0].mxu0
    %v562 = vpop.f32.mrb[0].mxu0
    %v563 = vadd.f32 0.0, %v562
    %v564 = vpop.f32.mrb[0].mxu0
    %565 = vdwg.mxu0
    %v566 = vpack.c.bf16 %v507, %v504
    %v567 = vpack.c.bf16 %v515, %v512
    %v568 = vpack.c.bf16 %v523, %v520
    %v569 = vpack.c.bf16 %v531, %v528
    %v570 = vpack.c.bf16 %v539, %v536
    %v571 = vpack.c.bf16 %v547, %v544
    %v572 = vpack.c.bf16 %v555, %v552
    %v573 = vpack.c.bf16 %v563, %v560
    %v575 = vlaneseq
    %v576 = vshrl.u32 %v575, 7
    %v577 = vsub.s32 0, %v576
    %v578 = vrot.slane %v460, %v577
    %580 = vmatprep.subr.bf16.mxu0 0
    %581 = vmatpush1.bf16.msra.mxu0 %v566
    %582 = vmatprep.subr.bf16.mxu0 0
    %583 = vmatpush1.bf16.msra.mxu0 %v567
    %584 = vmatprep.subr.bf16.mxu0 0
    %585 = vmatpush1.bf16.msra.mxu0 %v568
    %586 = vmatprep.subr.bf16.mxu0 0
    %587 = vmatpush1.bf16.msra.mxu0 %v569
    %588 = vmatprep.subr.bf16.mxu0 0
    %589 = vmatpush1.bf16.msra.mxu0 %v570
    %590 = vmatprep.subr.bf16.mxu0 0
    %591 = vmatpush1.bf16.msra.mxu0 %v571
    %592 = vmatprep.subr.bf16.mxu0 0
    %593 = vmatpush1.bf16.msra.mxu0 %v572
    %594 = vmatprep.subr.bf16.mxu0 0
    %595 = vmatpush1.bf16.msra.mxu0 %v573
    %596 = vmatprep.subr.bf16.mxu0 0
    %597 = vmatpush1.bf16.msra.mxu0 0
    %598 = vmatprep.subr.bf16.mxu0 0
    %599 = vmatpush1.bf16.msra.mxu0 0
    %600 = vmatprep.subr.bf16.mxu0 0
    %601 = vmatpush1.bf16.msra.mxu0 0
    %602 = vmatprep.subr.bf16.mxu0 0
    %603 = vmatpush1.bf16.msra.mxu0 0
    %604 = vmatprep.subr.bf16.mxu0 0
    %605 = vmatpush1.bf16.msra.mxu0 0
    %606 = vmatprep.subr.bf16.mxu0 0
    %607 = vmatpush1.bf16.msra.mxu0 0
    %608 = vmatprep.subr.bf16.mxu0 0
    %609 = vmatpush1.bf16.msra.mxu0 0
    %610 = vmatprep.subr.bf16.mxu0 0
    %611 = vmatpush1.bf16.msra.mxu0 0
    %612 = vmatprep.mubr.bf16.mxu0 0
    %613 = vmatmul.mubr.bf16.gmra.mrb[0].mxu0 %v307
    %v614 = vpop.f32.mrb[0].mxu0
    %v615 = vadd.f32 %v578, %v614
    %v616 = vpop.f32.mrb[0].mxu0
    %v617 = vpop.f32.mrb[0].mxu0
    %v618 = vadd.f32 %v578, %v617
    %v619 = vpop.f32.mrb[0].mxu0
    %620 = vmatprep.mubr.bf16.mxu0 0
    %621 = vmatmul.mubr.bf16.gmra.mrb[0].mxu0 %v308
    %v622 = vpop.f32.mrb[0].mxu0
    %v623 = vadd.f32 %v578, %v622
    %v624 = vpop.f32.mrb[0].mxu0
    %v625 = vpop.f32.mrb[0].mxu0
    %v626 = vadd.f32 %v578, %v625
    %v627 = vpop.f32.mrb[0].mxu0
    %628 = vmatprep.mubr.bf16.mxu0 0
    %629 = vmatmul.mubr.bf16.gmra.mrb[0].mxu0 %v309
    %v630 = vpop.f32.mrb[0].mxu0
    %v631 = vadd.f32 %v578, %v630
    %v632 = vpop.f32.mrb[0].mxu0
    %v633 = vpop.f32.mrb[0].mxu0
    %v634 = vadd.f32 %v578, %v633
    %v635 = vpop.f32.mrb[0].mxu0
    %636 = vmatprep.mubr.bf16.mxu0 0
    %637 = vmatmul.mubr.bf16.gmra.mrb[0].mxu0 %v310
    %v638 = vpop.f32.mrb[0].mxu0
    %v639 = vadd.f32 %v578, %v638
    %v640 = vpop.f32.mrb[0].mxu0
    %v641 = vpop.f32.mrb[0].mxu0
    %v642 = vadd.f32 %v578, %v641
    %v643 = vpop.f32.mrb[0].mxu0
    %644 = vmatprep.mubr.bf16.mxu0 0
    %645 = vmatmul.mubr.bf16.gmra.mrb[0].mxu0 %v311
    %v646 = vpop.f32.mrb[0].mxu0
    %v647 = vadd.f32 %v578, %v646
    %v648 = vpop.f32.mrb[0].mxu0
    %v649 = vpop.f32.mrb[0].mxu0
    %v650 = vadd.f32 %v578, %v649
    %v651 = vpop.f32.mrb[0].mxu0
    %652 = vmatprep.mubr.bf16.mxu0 0
    %653 = vmatmul.mubr.bf16.gmra.mrb[0].mxu0 %v312
    %v654 = vpop.f32.mrb[0].mxu0
    %v655 = vadd.f32 %v578, %v654
    %v656 = vpop.f32.mrb[0].mxu0
    %v657 = vpop.f32.mrb[0].mxu0
    %v658 = vadd.f32 %v578, %v657
    %v659 = vpop.f32.mrb[0].mxu0
    %660 = vmatprep.mubr.bf16.mxu0 0
    %661 = vmatmul.mubr.bf16.gmra.mrb[0].mxu0 %v313
    %v662 = vpop.f32.mrb[0].mxu0
    %v663 = vadd.f32 %v578, %v662
    %v664 = vpop.f32.mrb[0].mxu0
    %v665 = vpop.f32.mrb[0].mxu0
    %v666 = vadd.f32 %v578, %v665
    %v667 = vpop.f32.mrb[0].mxu0
    %668 = vmatprep.mubr.bf16.mxu0 0
    %669 = vmatmul.mubr.bf16.gmra.mrb[0].mxu0 %v314
    %v670 = vpop.f32.mrb[0].mxu0
    %v671 = vadd.f32 %v578, %v670
    %v672 = vpop.f32.mrb[0].mxu0
    %v673 = vpop.f32.mrb[0].mxu0
    %v674 = vadd.f32 %v578, %v673
    %v675 = vpop.f32.mrb[0].mxu0
    %676 = vdwg.mxu0
    %v677 = vmax.f32 %v615, 0.0
    %v678 = vmax.f32 %v618, 0.0
    %v679 = vmax.f32 %v623, 0.0
    %v680 = vmax.f32 %v626, 0.0
    %v681 = vmax.f32 %v631, 0.0
    %v682 = vmax.f32 %v634, 0.0
    %v683 = vmax.f32 %v639, 0.0
    %v684 = vmax.f32 %v642, 0.0
    %v685 = vmax.f32 %v647, 0.0
    %v686 = vmax.f32 %v650, 0.0
    %v687 = vmax.f32 %v655, 0.0
    %v688 = vmax.f32 %v658, 0.0
    %v689 = vmax.f32 %v663, 0.0
    %v690 = vmax.f32 %v666, 0.0
    %v691 = vmax.f32 %v671, 0.0
    %v692 = vmax.f32 %v674, 0.0
    %v693 = vld [vmem:[#allocation10] sm:$0xff]
    %v694 = vld [vmem:[#allocation10 + $0x8] sm:$0xff]
    %v695 = vld [vmem:[#allocation10 + $0x10] sm:$0xff]
    %v696 = vld [vmem:[#allocation10 + $0x18] sm:$0xff]
    %v697 = vld [vmem:[#allocation10 + $0x20] sm:$0xff]
    %v698 = vld [vmem:[#allocation10 + $0x28] sm:$0xff]
    %v699 = vld [vmem:[#allocation10 + $0x30] sm:$0xff]
    %v700 = vld [vmem:[#allocation10 + $0x38] sm:$0xff]
    %v701 = vld [vmem:[#allocation10 + $0x40] sm:$0xff]
    %v702 = vld [vmem:[#allocation10 + $0x48] sm:$0xff]
    %v703 = vld [vmem:[#allocation10 + $0x50] sm:$0xff]
    %v704 = vld [vmem:[#allocation10 + $0x58] sm:$0xff]
    %v705 = vld [vmem:[#allocation10 + $0x60] sm:$0xff]
    %v706 = vld [vmem:[#allocation10 + $0x68] sm:$0xff]
    %v707 = vld [vmem:[#allocation10 + $0x70] sm:$0xff]
    %v708 = vld [vmem:[#allocation10 + $0x78] sm:$0xff]
    %v709 = vpack.c.bf16 %v694, %v693
    %v710 = vpack.c.bf16 %v696, %v695
    %v711 = vpack.c.bf16 %v698, %v697
    %v712 = vpack.c.bf16 %v700, %v699
    %v713 = vpack.c.bf16 %v702, %v701
    %v714 = vpack.c.bf16 %v704, %v703
    %v715 = vpack.c.bf16 %v706, %v705
    %v716 = vpack.c.bf16 %v708, %v707
    %v717 = vld [vmem:[%s7] sm:$0x1]
    %v718 = vpack.c.bf16 %v678, %v677
    %v719 = vpack.c.bf16 %v680, %v679
    %v720 = vpack.c.bf16 %v682, %v681
    %v721 = vpack.c.bf16 %v684, %v683
    %v722 = vpack.c.bf16 %v686, %v685
    %v723 = vpack.c.bf16 %v688, %v687
    %v724 = vpack.c.bf16 %v690, %v689
    %v725 = vpack.c.bf16 %v692, %v691
    %726 = vmatprep.subr.bf16.mxu0 0
    %727 = vmatpush1.bf16.msra.mxu0 %v709
    %728 = vmatprep.subr.bf16.mxu0 0
    %729 = vmatpush1.bf16.msra.mxu0 %v710
    %730 = vmatprep.subr.bf16.mxu0 0
    %731 = vmatpush1.bf16.msra.mxu0 %v711
    %732 = vmatprep.subr.bf16.mxu0 0
    %733 = vmatpush1.bf16.msra.mxu0 %v712
    %734 = vmatprep.subr.bf16.mxu0 0
    %735 = vmatpush1.bf16.msra.mxu0 %v713
    %736 = vmatprep.subr.bf16.mxu0 0
    %737 = vmatpush1.bf16.msra.mxu0 %v714
    %738 = vmatprep.subr.bf16.mxu0 0
    %739 = vmatpush1.bf16.msra.mxu0 %v715
    %740 = vmatprep.subr.bf16.mxu0 0
    %741 = vmatpush1.bf16.msra.mxu0 %v716
    %742 = vmatprep.subr.bf16.mxu0 0
    %743 = vmatpush1.bf16.msra.mxu0 0
    %744 = vmatprep.subr.bf16.mxu0 0
    %745 = vmatpush1.bf16.msra.mxu0 0
    %746 = vmatprep.subr.bf16.mxu0 0
    %747 = vmatpush1.bf16.msra.mxu0 0
    %748 = vmatprep.subr.bf16.mxu0 0
    %749 = vmatpush1.bf16.msra.mxu0 0
    %750 = vmatprep.subr.bf16.mxu0 0
    %751 = vmatpush1.bf16.msra.mxu0 0
    %752 = vmatprep.subr.bf16.mxu0 0
    %753 = vmatpush1.bf16.msra.mxu0 0
    %754 = vmatprep.subr.bf16.mxu0 0
    %755 = vmatpush1.bf16.msra.mxu0 0
    %756 = vmatprep.subr.bf16.mxu0 0
    %757 = vmatpush1.bf16.msra.mxu0 0
    %758 = vmatprep.mubr.bf16.mxu0 0
    %759 = vmatmul.mubr.bf16.gmra.mrb[0].mxu0 %v718
    %v760 = vpop.f32.mrb[0].mxu0
    %v761 = vadd.f32 0.0, %v760
    %v762 = vpop.f32.mrb[0].mxu0
    %v763 = vpop.f32.mrb[0].mxu0
    %v764 = vadd.f32 0.0, %v763
    %v765 = vpop.f32.mrb[0].mxu0
    %766 = vmatprep.mubr.bf16.mxu0 0
    %767 = vmatmul.mubr.bf16.gmra.mrb[0].mxu0 %v719
    %v768 = vpop.f32.mrb[0].mxu0
    %v769 = vadd.f32 0.0, %v768
    %v770 = vpop.f32.mrb[0].mxu0
    %v771 = vpop.f32.mrb[0].mxu0
    %v772 = vadd.f32 0.0, %v771
    %v773 = vpop.f32.mrb[0].mxu0
    %774 = vmatprep.mubr.bf16.mxu0 0
    %775 = vmatmul.mubr.bf16.gmra.mrb[0].mxu0 %v720
    %v776 = vpop.f32.mrb[0].mxu0
    %v777 = vadd.f32 0.0, %v776
    %v778 = vpop.f32.mrb[0].mxu0
    %v779 = vpop.f32.mrb[0].mxu0
    %v780 = vadd.f32 0.0, %v779
    %v781 = vpop.f32.mrb[0].mxu0
    %782 = vmatprep.mubr.bf16.mxu0 0
    %783 = vmatmul.mubr.bf16.gmra.mrb[0].mxu0 %v721
    %v784 = vpop.f32.mrb[0].mxu0
    %v785 = vadd.f32 0.0, %v784
    %v786 = vpop.f32.mrb[0].mxu0
    %v787 = vpop.f32.mrb[0].mxu0
    %v788 = vadd.f32 0.0, %v787
    %v789 = vpop.f32.mrb[0].mxu0
    %790 = vmatprep.mubr.bf16.mxu0 0
    %791 = vmatmul.mubr.bf16.gmra.mrb[0].mxu0 %v722
    %v792 = vpop.f32.mrb[0].mxu0
    %v793 = vadd.f32 0.0, %v792
    %v794 = vpop.f32.mrb[0].mxu0
    %v795 = vpop.f32.mrb[0].mxu0
    %v796 = vadd.f32 0.0, %v795
    %v797 = vpop.f32.mrb[0].mxu0
    %798 = vmatprep.mubr.bf16.mxu0 0
    %799 = vmatmul.mubr.bf16.gmra.mrb[0].mxu0 %v723
    %v800 = vpop.f32.mrb[0].mxu0
    %v801 = vadd.f32 0.0, %v800
    %v802 = vpop.f32.mrb[0].mxu0
    %v803 = vpop.f32.mrb[0].mxu0
    %v804 = vadd.f32 0.0, %v803
    %v805 = vpop.f32.mrb[0].mxu0
    %806 = vmatprep.mubr.bf16.mxu0 0
    %807 = vmatmul.mubr.bf16.gmra.mrb[0].mxu0 %v724
    %v808 = vpop.f32.mrb[0].mxu0
    %v809 = vadd.f32 0.0, %v808
    %v810 = vpop.f32.mrb[0].mxu0
    %v811 = vpop.f32.mrb[0].mxu0
    %v812 = vadd.f32 0.0, %v811
    %v813 = vpop.f32.mrb[0].mxu0
    %814 = vmatprep.mubr.bf16.mxu0 0
    %815 = vmatmul.mubr.bf16.gmra.mrb[0].mxu0 %v725
    %v816 = vpop.f32.mrb[0].mxu0
    %v817 = vadd.f32 0.0, %v816
    %v818 = vpop.f32.mrb[0].mxu0
    %v819 = vpop.f32.mrb[0].mxu0
    %v820 = vadd.f32 0.0, %v819
    %v821 = vpop.f32.mrb[0].mxu0
    %822 = vdwg.mxu0
    %v823 = vpack.c.bf16 %v764, %v761
    %v824 = vpack.c.bf16 %v772, %v769
    %v825 = vpack.c.bf16 %v780, %v777
    %v826 = vpack.c.bf16 %v788, %v785
    %v827 = vpack.c.bf16 %v796, %v793
    %v828 = vpack.c.bf16 %v804, %v801
    %v829 = vpack.c.bf16 %v812, %v809
    %v830 = vpack.c.bf16 %v820, %v817
    %v832 = vlaneseq
    %v833 = vshrl.u32 %v832, 7
    %v834 = vsub.s32 0, %v833
    %v835 = vrot.slane %v717, %v834
    %837 = vmatprep.subr.bf16.mxu0 0
    %838 = vmatpush1.bf16.msra.mxu0 %v823
    %839 = vmatprep.subr.bf16.mxu0 0
    %840 = vmatpush1.bf16.msra.mxu0 %v824
    %841 = vmatprep.subr.bf16.mxu0 0
    %842 = vmatpush1.bf16.msra.mxu0 %v825
    %843 = vmatprep.subr.bf16.mxu0 0
    %844 = vmatpush1.bf16.msra.mxu0 %v826
    %845 = vmatprep.subr.bf16.mxu0 0
    %846 = vmatpush1.bf16.msra.mxu0 %v827
    %847 = vmatprep.subr.bf16.mxu0 0
    %848 = vmatpush1.bf16.msra.mxu0 %v828
    %849 = vmatprep.subr.bf16.mxu0 0
    %850 = vmatpush1.bf16.msra.mxu0 %v829
    %851 = vmatprep.subr.bf16.mxu0 0
    %852 = vmatpush1.bf16.msra.mxu0 %v830
    %853 = vmatprep.subr.bf16.mxu0 0
    %854 = vmatpush1.bf16.msra.mxu0 0
    %855 = vmatprep.subr.bf16.mxu0 0
    %856 = vmatpush1.bf16.msra.mxu0 0
    %857 = vmatprep.subr.bf16.mxu0 0
    %858 = vmatpush1.bf16.msra.mxu0 0
    %859 = vmatprep.subr.bf16.mxu0 0
    %860 = vmatpush1.bf16.msra.mxu0 0
    %861 = vmatprep.subr.bf16.mxu0 0
    %862 = vmatpush1.bf16.msra.mxu0 0
    %863 = vmatprep.subr.bf16.mxu0 0
    %864 = vmatpush1.bf16.msra.mxu0 0
    %865 = vmatprep.subr.bf16.mxu0 0
    %866 = vmatpush1.bf16.msra.mxu0 0
    %867 = vmatprep.subr.bf16.mxu0 0
    %868 = vmatpush1.bf16.msra.mxu0 0
    %869 = vmatprep.mubr.bf16.mxu0 0
    %870 = vmatmul.mubr.bf16.gmra.mrb[0].mxu0 %v307
    %v871 = vpop.f32.mrb[0].mxu0
    %v872 = vadd.f32 %v835, %v871
    %v873 = vpop.f32.mrb[0].mxu0
    %v874 = vpop.f32.mrb[0].mxu0
    %v875 = vadd.f32 %v835, %v874
    %v876 = vpop.f32.mrb[0].mxu0
    %877 = vmatprep.mubr.bf16.mxu0 0
    %878 = vmatmul.mubr.bf16.gmra.mrb[0].mxu0 %v308
    %v879 = vpop.f32.mrb[0].mxu0
    %v880 = vadd.f32 %v835, %v879
    %v881 = vpop.f32.mrb[0].mxu0
    %v882 = vpop.f32.mrb[0].mxu0
    %v883 = vadd.f32 %v835, %v882
    %v884 = vpop.f32.mrb[0].mxu0
    %885 = vmatprep.mubr.bf16.mxu0 0
    %886 = vmatmul.mubr.bf16.gmra.mrb[0].mxu0 %v309
    %v887 = vpop.f32.mrb[0].mxu0
    %v888 = vadd.f32 %v835, %v887
    %v889 = vpop.f32.mrb[0].mxu0
    %v890 = vpop.f32.mrb[0].mxu0
    %v891 = vadd.f32 %v835, %v890
    %v892 = vpop.f32.mrb[0].mxu0
    %893 = vmatprep.mubr.bf16.mxu0 0
    %894 = vmatmul.mubr.bf16.gmra.mrb[0].mxu0 %v310
    %v895 = vpop.f32.mrb[0].mxu0
    %v896 = vadd.f32 %v835, %v895
    %v897 = vpop.f32.mrb[0].mxu0
    %v898 = vpop.f32.mrb[0].mxu0
    %v899 = vadd.f32 %v835, %v898
    %v900 = vpop.f32.mrb[0].mxu0
    %901 = vmatprep.mubr.bf16.mxu0 0
    %902 = vmatmul.mubr.bf16.gmra.mrb[0].mxu0 %v311
    %v903 = vpop.f32.mrb[0].mxu0
    %v904 = vadd.f32 %v835, %v903
    %v905 = vpop.f32.mrb[0].mxu0
    %v906 = vpop.f32.mrb[0].mxu0
    %v907 = vadd.f32 %v835, %v906
    %v908 = vpop.f32.mrb[0].mxu0
    %909 = vmatprep.mubr.bf16.mxu0 0
    %910 = vmatmul.mubr.bf16.gmra.mrb[0].mxu0 %v312
    %v911 = vpop.f32.mrb[0].mxu0
    %v912 = vadd.f32 %v835, %v911
    %v913 = vpop.f32.mrb[0].mxu0
    %v914 = vpop.f32.mrb[0].mxu0
    %v915 = vadd.f32 %v835, %v914
    %v916 = vpop.f32.mrb[0].mxu0
    %917 = vmatprep.mubr.bf16.mxu0 0
    %918 = vmatmul.mubr.bf16.gmra.mrb[0].mxu0 %v313
    %v919 = vpop.f32.mrb[0].mxu0
    %v920 = vadd.f32 %v835, %v919
    %v921 = vpop.f32.mrb[0].mxu0
    %v922 = vpop.f32.mrb[0].mxu0
    %v923 = vadd.f32 %v835, %v922
    %v924 = vpop.f32.mrb[0].mxu0
    %925 = vmatprep.mubr.bf16.mxu0 0
    %926 = vmatmul.mubr.bf16.gmra.mrb[0].mxu0 %v314
    %v927 = vpop.f32.mrb[0].mxu0
    %v928 = vadd.f32 %v835, %v927
    %v929 = vpop.f32.mrb[0].mxu0
    %v930 = vpop.f32.mrb[0].mxu0
    %v931 = vadd.f32 %v835, %v930
    %v932 = vpop.f32.mrb[0].mxu0
    %933 = vdwg.mxu0
    %934 = vst [vmem:[#allocation11] sm:$0xff] %v872
    %935 = vst [vmem:[#allocation11 + $0x8] sm:$0xff] %v875
    %936 = vst [vmem:[#allocation11 + $0x10] sm:$0xff] %v880
    %937 = vst [vmem:[#allocation11 + $0x18] sm:$0xff] %v883
    %938 = vst [vmem:[#allocation11 + $0x20] sm:$0xff] %v888
    %939 = vst [vmem:[#allocation11 + $0x28] sm:$0xff] %v891
    %940 = vst [vmem:[#allocation11 + $0x30] sm:$0xff] %v896
    %941 = vst [vmem:[#allocation11 + $0x38] sm:$0xff] %v899
    %942 = vst [vmem:[#allocation11 + $0x40] sm:$0xff] %v904
    %943 = vst [vmem:[#allocation11 + $0x48] sm:$0xff] %v907
    %944 = vst [vmem:[#allocation11 + $0x50] sm:$0xff] %v912
    %945 = vst [vmem:[#allocation11 + $0x58] sm:$0xff] %v915
    %946 = vst [vmem:[#allocation11 + $0x60] sm:$0xff] %v920
    %947 = vst [vmem:[#allocation11 + $0x68] sm:$0xff] %v923
    %948 = vst [vmem:[#allocation11 + $0x70] sm:$0xff] %v928
    %949 = vst [vmem:[#allocation11 + $0x78] sm:$0xff] %v931
    // Predicated region
    $region54: #{tpu_custom_call.1} parent=1 // pred_check
      _
    $region55: #{tpu_custom_call.1} parent=1 // pred_check_branch
      %951 = sbr.rel (0) target = $region57
    $region56: #{tpu_custom_call.1} parent=1 // pred_region
      %s953 = ssub.s32 2048, 2048
      %954 = vsyncadd [#allocation4], %s953
      %s955 = sshll.u32 [#allocation11], 4
      %s956 = int_to_ptr.vmem [resolvable:$true] %s955
      %961 = dma.vmem_to_hbm [thread:$0]  %s956, 2048, %s8, [#allocation4], 128, 128, 8
    $region57: #{tpu_custom_call.1} parent=1 // pred_fallthru
      _
    // Predicated region
    $region58: #{tpu_custom_call.1} parent=1 // pred_check
      _
    $region59: #{tpu_custom_call.1} parent=1 // pred_check_branch
      %963 = sbr.rel (0) target = $region61
    $region60: #{tpu_custom_call.1} parent=1 // pred_region
      %964 = dma.done [#allocation4], 2048
    $region61: #{tpu_custom_call.1} parent=1 // pred_fallthru
      _
    %965 = vsyncpa [#allocation3], 1
    %966 = vsyncpa [#allocation6], 1
    %967 = vsyncpa [#allocation9], 1
    %968 = vsyncpa [#allocation4], 1

</llo_original>
